<compile_context>
chip_gen: v7x
topology: tpu7x:2x2x1
jax: 0.10.0
libtpu: 0.0.40
codegen_flags: <defaults>
</compile_context>

<pallas_src>
import functools

import jax
import jax.numpy as jnp
from jax.experimental import pallas as pl
from jax.experimental.pallas import tpu as pltpu


# ---------------------------------------------------------------------------
# Kernels
# ---------------------------------------------------------------------------
def _scse_fused_kernel(x_ref, w1t_ref, b1_ref, w2_ref, b2_ref, wsr_ref, bs_ref,
                       o_ref, *, inv_hw):
    # x block: (1, C, HWp) -> (C, HWp), HW on the lane axis.
    x = x_ref[0]

    # ---- channel squeeze & excitation (cSE) ----
    # gap over the lane axis; divide by the *true* HW (padding columns are 0).
    gap = jnp.sum(x, axis=1, keepdims=True) * inv_hw                      # (C, 1)
    h = jnp.dot(w1t_ref[...], gap, preferred_element_type=jnp.float32)    # (Cr, 1)
    h = jnp.maximum(h + b1_ref[...], 0.0)                                 # ReLU
    c = jnp.dot(w2_ref[...], h, preferred_element_type=jnp.float32)       # (C, 1)
    c_scale = jax.nn.sigmoid(c + b2_ref[...])                             # (C, 1)

    # ---- spatial squeeze & excitation (sSE), lane-dense (1, HWp) output ----
    s = jnp.dot(wsr_ref[...], x, preferred_element_type=jnp.float32)      # (1, HWp)
    s_scale = jax.nn.sigmoid(s + bs_ref[0])                               # (1, HWp)

    # ---- fused combine: x*cSE + x*sSE == x*(cSE + sSE) ----
    o_ref[0] = x * (c_scale + s_scale)


def _scse_tiled_kernel(x_ref, cs_ref, wsr_ref, bs_ref, o_ref):
    # x block: (1, C, T) -> (C, T); cSE scale precomputed per (batch, channel).
    x = x_ref[0]
    s = jnp.dot(wsr_ref[...], x, preferred_element_type=jnp.float32)      # (1, T)
    s_scale = jax.nn.sigmoid(s + bs_ref[0])                               # (1, T)
    o_ref[0] = x * (cs_ref[0] + s_scale)                                  # (C,1)+(1,T)


# ---------------------------------------------------------------------------
# Wrapper
# ---------------------------------------------------------------------------
_FUSED_MAX_BLOCK_BYTES = 4 * 1024 * 1024   # per-batch (C, HW) f32 block ceiling
_TILED_MAX_BLOCK_BYTES = 1 * 1024 * 1024   # per-tile (C, T) f32 block ceiling
_VMEM_LIMIT_BYTES = 32 * 1024 * 1024       # safe on v5e / v6e / v7x


def _round_up(n, m):
    return ((n + m - 1) // m) * m


def _choose_hw_tile(hw_padded, channels, max_block_bytes):
    """Largest multiple of 128 that divides hw_padded and fits the byte budget."""
    max_elems = max(128, (max_block_bytes // (4 * channels)) // 128 * 128)
    tile = 128
    for cand in range(128, hw_padded + 1, 128):
        if hw_padded % cand == 0 and cand <= max_elems:
            tile = cand
    return tile


def scse_forward(x_nchw, params, *, hw_tile=None, force_tiled=False):
    """x_nchw: (B, C, H, W) float32.  Returns (B, C, H, W)."""
    w1t, b1, w2, b2, wsr, bs = params
    B, C, H, W = x_nchw.shape
    HW = H * W
    Cr = w1t.shape[0]

    # Free relayout: NCHW -> (B, C, HW) with HW on the lane axis.
    x = x_nchw.reshape(B, C, HW)
    HWp = _round_up(HW, 128)
    if HWp != HW:
        # Zero-pad lanes; padded columns contribute 0 to gap (we divide by true
        # HW) and produce 0 outputs (x==0 there), sliced off afterwards.
        x = jnp.pad(x, ((0, 0), (0, 0), (0, HWp - HW)))

    block_bytes = C * HWp * 4
    use_fused = (not force_tiled) and hw_tile is None \
        and block_bytes <= _FUSED_MAX_BLOCK_BYTES

    bytes_accessed = 2 * B * C * HWp * 4
    flops = int(B * (4 * C * HWp + 4 * C * Cr))
    transcend = int(B * (HWp + C))
    cost = pl.CostEstimate(flops=flops, transcendentals=transcend,
                           bytes_accessed=bytes_accessed)

    if use_fused:
        kernel = functools.partial(_scse_fused_kernel, inv_hw=1.0 / HW)
        out = pl.pallas_call(
            kernel,
            out_shape=jax.ShapeDtypeStruct((B, C, HWp), jnp.float32),
            grid_spec=pltpu.PrefetchScalarGridSpec(
                num_scalar_prefetch=0,
                grid=(B,),
                in_specs=[
                    pl.BlockSpec((1, C, HWp), lambda b: (b, 0, 0)),   # x
                    pl.BlockSpec((Cr, C), lambda b: (0, 0)),          # w1 (cSE conv1)
                    pl.BlockSpec((Cr, 1), lambda b: (0, 0)),          # b1
                    pl.BlockSpec((C, Cr), lambda b: (0, 0)),          # w2 (cSE conv2)
                    pl.BlockSpec((C, 1), lambda b: (0, 0)),           # b2
                    pl.BlockSpec((1, C), lambda b: (0, 0)),           # ws (sSE conv)
                    pl.BlockSpec(memory_space=pltpu.MemorySpace.SMEM),  # bs scalar
                ],
                out_specs=pl.BlockSpec((1, C, HWp), lambda b: (b, 0, 0)),
            ),
            compiler_params=pltpu.CompilerParams(
                dimension_semantics=("parallel",),
                vmem_limit_bytes=_VMEM_LIMIT_BYTES,
            ),
            cost_estimate=cost,
        )(x, w1t, b1, w2, b2, wsr, bs)
    else:
        # Tiny cSE scale (O(B*C) work) precomputed in plain JAX so the kernel
        # only needs an HW tile resident.
        gap = jnp.mean(x_nchw.reshape(B, C, HW), axis=2)                   # (B, C)
        h = jnp.maximum(gap @ w1t.T + b1[:, 0], 0.0)                       # (B, Cr)
        c_scale = jax.nn.sigmoid(h @ w2.T + b2[:, 0])[:, :, None]          # (B, C, 1)

        T = hw_tile if hw_tile is not None else _choose_hw_tile(
            HWp, C, _TILED_MAX_BLOCK_BYTES)
        assert T % 128 == 0 and HWp % T == 0, "hw_tile must be a 128-multiple dividing padded HW"
        n_t = HWp // T

        out = pl.pallas_call(
            _scse_tiled_kernel,
            out_shape=jax.ShapeDtypeStruct((B, C, HWp), jnp.float32),
            grid_spec=pltpu.PrefetchScalarGridSpec(
                num_scalar_prefetch=0,
                grid=(B, n_t),
                in_specs=[
                    pl.BlockSpec((1, C, T), lambda b, j: (b, 0, j)),   # x tile
                    pl.BlockSpec((1, C, 1), lambda b, j: (b, 0, 0)),   # cSE scale
                    pl.BlockSpec((1, C), lambda b, j: (0, 0)),         # ws
                    pl.BlockSpec(memory_space=pltpu.MemorySpace.SMEM),  # bs scalar
                ],
                out_specs=pl.BlockSpec((1, C, T), lambda b, j: (b, 0, j)),
            ),
            compiler_params=pltpu.CompilerParams(
                dimension_semantics=("parallel", "parallel"),
                vmem_limit_bytes=_VMEM_LIMIT_BYTES,
            ),
            cost_estimate=cost,
        )(x, c_scale, wsr, bs)

    if HWp != HW:
        out = out[:, :, :HW]
    return out.reshape(B, C, H, W)


# ---------------------------------------------------------------------------
# Parameter init (mimics kaiming_normal_(fan_out, relu) + PyTorch bias init)
# ---------------------------------------------------------------------------
def init_params(key, in_channels, reduction=16):
    C = in_channels
    Cr = C // reduction
    assert Cr >= 1, "in_channels must be >= reduction (PyTorch would build a 0-channel conv)"
    k1, k2, k3, k4, k5, k6 = jax.random.split(key, 6)

    def kaiming_fan_out(k, out_ch, in_ch):
        # 1x1 conv weight (out, in, 1, 1): fan_out = out_ch -> std = sqrt(2/out_ch)
        std = (2.0 / out_ch) ** 0.5
        return std * jax.random.normal(k, (out_ch, in_ch), dtype=jnp.float32)

    def bias_init(k, fan_in, shape):
        bound = 1.0 / (fan_in ** 0.5)
        return jax.random.uniform(k, shape, minval=-bound, maxval=bound,
                                  dtype=jnp.float32)

    w1t = kaiming_fan_out(k1, Cr, C)    # cSE conv1 weight: (Cr, C)
    b1 = bias_init(k2, C, (Cr, 1))
    w2 = kaiming_fan_out(k3, C, Cr)     # cSE conv2 weight: (C, Cr)
    b2 = bias_init(k4, Cr, (C, 1))
    wsr = kaiming_fan_out(k5, 1, C)     # sSE conv weight:  (1, C)
    bs = bias_init(k6, C, (1,))
    return (w1t, b1, w2, b2, wsr, bs)


def scse_reference(x_nchw, params):
    """Pure-JAX reference for correctness checking (NCHW in/out)."""
    w1t, b1, w2, b2, wsr, bs = params
    gap = jnp.mean(x_nchw, axis=(2, 3))                                   # (B, C)
    h = jnp.maximum(gap @ w1t.T + b1[:, 0], 0.0)                          # (B, Cr)
    c = jax.nn.sigmoid(h @ w2.T + b2[:, 0])                               # (B, C)
    s = jax.nn.sigmoid(jnp.einsum('bchw,c->bhw', x_nchw, wsr[0]) + bs[0])  # (B,H,W)
    return x_nchw * c[:, :, None, None] + x_nchw * s[:, None, :, :]


if __name__ == "__main__":
    key = jax.random.PRNGKey(0)
    k_x, k_p = jax.random.split(key)

    B, C, H, W = 2, 32, 16, 16   # in_channels=32, reduction=16 -> hidden=2
    x = jax.random.normal(k_x, (B, C, H, W), dtype=jnp.float32)
    params = init_params(k_p, C, reduction=16)

    ref = scse_reference(x, params)

    fwd = jax.jit(scse_forward, static_argnames=("hw_tile", "force_tiled"))

    # Fused path (whole (C, HW) block per batch, gap in-kernel).
    out_fused = jax.block_until_ready(fwd(x, params))
    assert out_fused.shape == (B, C, H, W)
    assert jnp.allclose(out_fused, ref, atol=1e-4, rtol=1e-4), "fused path mismatch"

    # Tiled path (HW tiling + precomputed cSE scale; what v7x/v5e would use).
    out_tiled = jax.block_until_ready(fwd(x, params, force_tiled=True, hw_tile=128))
    assert jnp.allclose(out_tiled, ref, atol=1e-4, rtol=1e-4), "tiled path mismatch"

    print("KERNEL_OK")
</pallas_src>

<mosaic_0001>
module attributes {stable_mosaic.version = 11 : i64} {
  func.func @_scse_fused_kernel(%arg0: i32, %arg1: memref<1x32x256xf32, #tpu.memory_space<vmem>>, %arg2: memref<2x32xf32, #tpu.memory_space<vmem>>, %arg3: memref<2x1xf32, #tpu.memory_space<vmem>>, %arg4: memref<32x2xf32, #tpu.memory_space<vmem>>, %arg5: memref<32x1xf32, #tpu.memory_space<vmem>>, %arg6: memref<1x32xf32, #tpu.memory_space<vmem>>, %arg7: memref<1xf32, #tpu.memory_space<smem>>, %arg8: memref<1x32x256xf32, #tpu.memory_space<vmem>>) attributes {dimension_semantics = [#tpu.dimension_semantics<parallel>], iteration_bounds = array<i64: 2>, scalar_prefetch = 0 : i64, scratch_operands = 0 : i64, tpu.core_type = #tpu.core_type<tc>, window_params = [{transform_indices = @transform_0, window_bounds = array<i64: 1, 32, 256>}, {pipeline_mode = #tpu.pipeline_mode<synchronous>, transform_indices = @transform_1, window_bounds = array<i64: 2, 32>}, {pipeline_mode = #tpu.pipeline_mode<synchronous>, transform_indices = @transform_2, window_bounds = array<i64: 2, 1>}, {pipeline_mode = #tpu.pipeline_mode<synchronous>, transform_indices = @transform_3, window_bounds = array<i64: 32, 2>}, {pipeline_mode = #tpu.pipeline_mode<synchronous>, transform_indices = @transform_4, window_bounds = array<i64: 32, 1>}, {pipeline_mode = #tpu.pipeline_mode<synchronous>, transform_indices = @transform_5, window_bounds = array<i64: 1, 32>}, {transform_indices = @transform_6, window_bounds = array<i64: 1>}, {transform_indices = @transform_7, window_bounds = array<i64: 1, 32, 256>}]} {
    %c0 = arith.constant 0 : index
    %c0_0 = arith.constant 0 : index
    %c0_1 = arith.constant 0 : index
    %0 = vector.load %arg1[%c0, %c0_0, %c0_1] : memref<1x32x256xf32, #tpu.memory_space<vmem>>, vector<1x32x256xf32>
    %1 = vector.shape_cast %0 : vector<1x32x256xf32> to vector<32x256xf32>
    %cst = arith.constant dense<0.000000e+00> : vector<32xf32>
    %2 = vector.multi_reduction <add>, %1, %cst [1] : vector<32x256xf32> to vector<32xf32>
    %3 = vector.shape_cast %2 : vector<32xf32> to vector<32x1xf32>
    %cst_2 = arith.constant 3.906250e-03 : f32
    %4 = vector.broadcast %cst_2 : f32 to vector<32x1xf32>
    %5 = arith.mulf %3, %4 : vector<32x1xf32>
    %c0_3 = arith.constant 0 : index
    %c0_4 = arith.constant 0 : index
    %6 = vector.load %arg2[%c0_3, %c0_4] : memref<2x32xf32, #tpu.memory_space<vmem>>, vector<2x32xf32>
    %cst_5 = arith.constant dense<0.000000e+00> : vector<2x1xf32>
    %7 = tpu.matmul %6, %5, %cst_5 {dimension_numbers = #tpu.dot_dimension_numbers<[1], [0], [0], [1], [0, 0, 1, 1], [], []>} : vector<2x32xf32>, vector<32x1xf32>, vector<2x1xf32> -> vector<2x1xf32>
    %c0_6 = arith.constant 0 : index
    %c0_7 = arith.constant 0 : index
    %8 = vector.load %arg3[%c0_6, %c0_7] : memref<2x1xf32, #tpu.memory_space<vmem>>, vector<2x1xf32>
    %9 = arith.addf %7, %8 : vector<2x1xf32>
    %cst_8 = arith.constant 0.000000e+00 : f32
    %10 = vector.broadcast %cst_8 : f32 to vector<2x1xf32>
    %11 = arith.maximumf %9, %10 : vector<2x1xf32>
    %c0_9 = arith.constant 0 : index
    %c0_10 = arith.constant 0 : index
    %12 = vector.load %arg4[%c0_9, %c0_10] : memref<32x2xf32, #tpu.memory_space<vmem>>, vector<32x2xf32>
    %cst_11 = arith.constant dense<0.000000e+00> : vector<32x1xf32>
    %13 = tpu.matmul %12, %11, %cst_11 {dimension_numbers = #tpu.dot_dimension_numbers<[1], [0], [0], [1], [0, 0, 1, 1], [], []>} : vector<32x2xf32>, vector<2x1xf32>, vector<32x1xf32> -> vector<32x1xf32>
    %c0_12 = arith.constant 0 : index
    %c0_13 = arith.constant 0 : index
    %14 = vector.load %arg5[%c0_12, %c0_13] : memref<32x1xf32, #tpu.memory_space<vmem>>, vector<32x1xf32>
    %15 = arith.addf %13, %14 : vector<32x1xf32>
    %16 = arith.negf %15 : vector<32x1xf32>
    %17 = math.exp %16 : vector<32x1xf32>
    %cst_14 = arith.constant 1.000000e+00 : f32
    %18 = vector.broadcast %cst_14 : f32 to vector<32x1xf32>
    %19 = arith.addf %18, %17 : vector<32x1xf32>
    %20 = arith.divf %18, %19 : vector<32x1xf32>
    %c0_15 = arith.constant 0 : index
    %c0_16 = arith.constant 0 : index
    %21 = vector.load %arg6[%c0_15, %c0_16] : memref<1x32xf32, #tpu.memory_space<vmem>>, vector<1x32xf32>
    %cst_17 = arith.constant dense<0.000000e+00> : vector<1x256xf32>
    %22 = tpu.matmul %21, %1, %cst_17 {dimension_numbers = #tpu.dot_dimension_numbers<[1], [0], [0], [1], [0, 0, 1, 1], [], []>} : vector<1x32xf32>, vector<32x256xf32>, vector<1x256xf32> -> vector<1x256xf32>
    %c0_18 = arith.constant 0 : index
    %23 = memref.load %arg7[%c0_18] : memref<1xf32, #tpu.memory_space<smem>>
    %24 = vector.broadcast %23 : f32 to vector<1x256xf32>
    %25 = arith.addf %22, %24 : vector<1x256xf32>
    %26 = arith.negf %25 : vector<1x256xf32>
    %27 = math.exp %26 : vector<1x256xf32>
    %cst_19 = arith.constant 1.000000e+00 : f32
    %28 = vector.broadcast %cst_19 : f32 to vector<1x256xf32>
    %29 = arith.addf %28, %27 : vector<1x256xf32>
    %30 = arith.divf %28, %29 : vector<1x256xf32>
    %31 = vector.broadcast %20 : vector<32x1xf32> to vector<32x256xf32>
    %32 = vector.broadcast %30 : vector<1x256xf32> to vector<32x256xf32>
    %33 = arith.addf %31, %32 : vector<32x256xf32>
    %34 = arith.mulf %1, %33 : vector<32x256xf32>
    %c0_20 = arith.constant 0 : index
    %c0_21 = arith.constant 0 : index
    %c0_22 = arith.constant 0 : index
    %35 = vector.load %arg8[%c0_20, %c0_21, %c0_22] : memref<1x32x256xf32, #tpu.memory_space<vmem>>, vector<1x32x256xf32>
    %36 = vector.shape_cast %35 : vector<1x32x256xf32> to vector<32x256xf32>
    %37 = vector.shape_cast %34 : vector<32x256xf32> to vector<1x32x256xf32>
    tpu.vector_store %arg8[%c0_20, %c0_21, %c0_22], %37 {strides = array<i32>} : memref<1x32x256xf32, #tpu.memory_space<vmem>>, vector<1x32x256xf32>,
    return
  }
  func.func @transform_0(%arg0: i32) -> (i32, i32, i32) {
    %c0_i32 = arith.constant 0 : i32
    %c0_i32_0 = arith.constant 0 : i32
    %c0_i32_1 = arith.constant 0 : i32
    return %arg0, %c0_i32, %c0_i32_0 : i32, i32, i32
  }
  func.func @transform_1(%arg0: i32) -> (i32, i32) {
    %c0_i32 = arith.constant 0 : i32
    %c0_i32_0 = arith.constant 0 : i32
    %c0_i32_1 = arith.constant 0 : i32
    return %c0_i32, %c0_i32_0 : i32, i32
  }
  func.func @transform_2(%arg0: i32) -> (i32, i32) {
    %c0_i32 = arith.constant 0 : i32
    %c0_i32_0 = arith.constant 0 : i32
    %c0_i32_1 = arith.constant 0 : i32
    return %c0_i32, %c0_i32_0 : i32, i32
  }
  func.func @transform_3(%arg0: i32) -> (i32, i32) {
    %c0_i32 = arith.constant 0 : i32
    %c0_i32_0 = arith.constant 0 : i32
    %c0_i32_1 = arith.constant 0 : i32
    return %c0_i32, %c0_i32_0 : i32, i32
  }
  func.func @transform_4(%arg0: i32) -> (i32, i32) {
    %c0_i32 = arith.constant 0 : i32
    %c0_i32_0 = arith.constant 0 : i32
    %c0_i32_1 = arith.constant 0 : i32
    return %c0_i32, %c0_i32_0 : i32, i32
  }
  func.func @transform_5(%arg0: i32) -> (i32, i32) {
    %c0_i32 = arith.constant 0 : i32
    %c0_i32_0 = arith.constant 0 : i32
    %c0_i32_1 = arith.constant 0 : i32
    return %c0_i32, %c0_i32_0 : i32, i32
  }
  func.func @transform_6(%arg0: i32) -> i32 {
    %c0_i32 = arith.constant 0 : i32
    %c0_i32_0 = arith.constant 0 : i32
    return %c0_i32 : i32
  }
  func.func @transform_7(%arg0: i32) -> (i32, i32, i32) {
    %c0_i32 = arith.constant 0 : i32
    %c0_i32_0 = arith.constant 0 : i32
    %c0_i32_1 = arith.constant 0 : i32
    return %arg0, %c0_i32, %c0_i32_0 : i32, i32, i32
  }
}

</mosaic_0001>

<llo_original>
// kernel: scse_forward.1
$region0: #{scse_forward.1}
  #allocation0 [shape = 'u32[]', space=smem, size = 0x4, offset = 0x4, fixed_abs, tag = 'smem constant byte address 0x4 - core index']
  #allocation1 [shape = 'u32[144,128]{1,0:T(1,128)}', space=vmem, size = 0x12000, scoped, tag = 'internal scratch']
  #allocation2 [shape = 'f32[1]{0:T(128)S(6)}', space=smem, size = 0x200, scoped, tag = 'scoped memory for scse_forward.1']
  %s0 = inlined_call_operand.vmem [shape: f32[2,32,256], index: 0, kind: input, shape index: {}]
  %s1 = inlined_call_operand.vmem [shape: f32[2,32], index: 1, kind: input, shape index: {}]
  %s2 = inlined_call_operand.vmem [shape: f32[2,1], index: 2, kind: input, shape index: {}]
  %s3 = inlined_call_operand.vmem [shape: f32[32,2], index: 3, kind: input, shape index: {}]
  %s4 = inlined_call_operand.vmem [shape: f32[32,1], index: 4, kind: input, shape index: {}]
  %s5 = inlined_call_operand.vmem [shape: f32[1,32], index: 5, kind: input, shape index: {}]
  %s6 = inlined_call_operand.<no memory space> [shape: f32[1], index: 6, kind: input, shape index: {}]
  %s7 = inlined_call_operand.vmem [shape: f32[2,32,256], index: 7, kind: output, shape index: {}]
  %s8 = sld [smem:[#allocation0]]
  $region61: #{scse_forward.1} parent=0
    _
  %s10 = ssub.s32 1, %s8
  %s11 = scalar_select 0, %s10, %s8
  %12 = sst [smem:[#allocation2]] %s6
  loop: start=0, step=1, limit=4
  $region2: #{scse_forward.1} parent=0 // loop_pre_header
    _
  $region3: #{scse_forward.1} parent=0 // loop_header
    %s14 = sphi 0, %s18
    %p15 = scmp.ge.s32.totalorder %s14, 4
    %s24 = sphi 0, %s26
    %s27 = sphi 0, %s24
    %s28 = sphi 0, %s27
    %s44 = sphi 0, %s28
    %s48 = sphi 0, %s48
    %s50 = sphi 0, %s48
    %s51 = sphi 0, %s50
    %s65 = sphi 0, %s51
    %s69 = sphi 0, %s69
    %s71 = sphi 0, %s69
    %s72 = sphi 0, %s71
    %s86 = sphi 0, %s72
    %s90 = sphi 0, %s90
    %s92 = sphi 0, %s90
    %s93 = sphi 0, %s92
    %s107 = sphi 0, %s93
    %s111 = sphi 0, %s111
    %s113 = sphi 0, %s111
    %s114 = sphi 0, %s113
    %s128 = sphi 0, %s114
    %s132 = sphi 0, %s132
    %s134 = sphi 0, %s132
    %s135 = sphi 0, %s134
    %s149 = sphi 0, %s135
    %s153 = sphi 0, %s153
    %s155 = sphi 0, %s153
    %s156 = sphi 0, %s155
    %s170 = sphi 0, %s156
    %s176 = sphi 0, %s178
    %s179 = sphi 0, %s176
    %s180 = sphi 0, %s179
    %s196 = sphi 0, %s180
  $region4: #{scse_forward.1} parent=0 // loop_header_branch
    %17 = sbr.rel (%p15) target = $region8
  $region5: #{scse_forward.1} parent=0 // loop_body
    %s19 = ssub.s32 %s14, 1
    %s20 = ssub.s32 %s14, 2
    %s21 = sadd.s32 %s14, 1
    %s22 = ssub.s32 %s14, %s21
    %p23 = scmp.eq.s32.totalorder %s22, 0
    %s25 = sadd.s32 %s24, 1
    %s26 = scalar_select %p23, %s24, %s25
    %p29 = pneg %p23
    %p30 = scmp.eq.s32.totalorder %s14, 1
    %p31 = por %p29, %p30
    %p32 = scmp.ne.s32.totalorder %s24, %s27
    %p33 = scmp.eq.s32.totalorder %s14, 0
    %p34 = por %p32, %p33
    %p35 = scmp.ne.s32.totalorder %s24, %s27
    %p36 = scmp.eq.s32.totalorder %s19, 1
    %p37 = por %p35, %p36
    %p38 = scmp.ne.s32.totalorder %s27, %s28
    %p39 = scmp.eq.s32.totalorder %s19, 0
    %p40 = por %p38, %p39
    %p41 = scmp.ne.s32.totalorder %s27, %s28
    %p42 = scmp.eq.s32.totalorder %s20, 1
    %p43 = por %p41, %p42
    %p45 = scmp.ne.s32.totalorder %s28, %s44
    %p46 = scmp.eq.s32.totalorder %s20, 0
    %p47 = por %p45, %p46
    %s49 = sadd.s32 %s48, 1
    %p52 = scmp.eq.s32.totalorder %s14, 1
    %p53 = scmp.ne.s32.totalorder %s48, %s50
    %p54 = scmp.eq.s32.totalorder %s14, 0
    %p55 = por %p53, %p54
    %p56 = scmp.ne.s32.totalorder %s48, %s50
    %p57 = scmp.eq.s32.totalorder %s19, 1
    %p58 = por %p56, %p57
    %p59 = scmp.ne.s32.totalorder %s50, %s51
    %p60 = scmp.eq.s32.totalorder %s19, 0
    %p61 = por %p59, %p60
    %p62 = scmp.ne.s32.totalorder %s50, %s51
    %p63 = scmp.eq.s32.totalorder %s20, 1
    %p64 = por %p62, %p63
    %p66 = scmp.ne.s32.totalorder %s51, %s65
    %p67 = scmp.eq.s32.totalorder %s20, 0
    %p68 = por %p66, %p67
    %s70 = sadd.s32 %s69, 1
    %p73 = scmp.eq.s32.totalorder %s14, 1
    %p74 = scmp.ne.s32.totalorder %s69, %s71
    %p75 = scmp.eq.s32.totalorder %s14, 0
    %p76 = por %p74, %p75
    %p77 = scmp.ne.s32.totalorder %s69, %s71
    %p78 = scmp.eq.s32.totalorder %s19, 1
    %p79 = por %p77, %p78
    %p80 = scmp.ne.s32.totalorder %s71, %s72
    %p81 = scmp.eq.s32.totalorder %s19, 0
    %p82 = por %p80, %p81
    %p83 = scmp.ne.s32.totalorder %s71, %s72
    %p84 = scmp.eq.s32.totalorder %s20, 1
    %p85 = por %p83, %p84
    %p87 = scmp.ne.s32.totalorder %s72, %s86
    %p88 = scmp.eq.s32.totalorder %s20, 0
    %p89 = por %p87, %p88
    %s91 = sadd.s32 %s90, 1
    %p94 = scmp.eq.s32.totalorder %s14, 1
    %p95 = scmp.ne.s32.totalorder %s90, %s92
    %p96 = scmp.eq.s32.totalorder %s14, 0
    %p97 = por %p95, %p96
    %p98 = scmp.ne.s32.totalorder %s90, %s92
    %p99 = scmp.eq.s32.totalorder %s19, 1
    %p100 = por %p98, %p99
    %p101 = scmp.ne.s32.totalorder %s92, %s93
    %p102 = scmp.eq.s32.totalorder %s19, 0
    %p103 = por %p101, %p102
    %p104 = scmp.ne.s32.totalorder %s92, %s93
    %p105 = scmp.eq.s32.totalorder %s20, 1
    %p106 = por %p104, %p105
    %p108 = scmp.ne.s32.totalorder %s93, %s107
    %p109 = scmp.eq.s32.totalorder %s20, 0
    %p110 = por %p108, %p109
    %s112 = sadd.s32 %s111, 1
    %p115 = scmp.eq.s32.totalorder %s14, 1
    %p116 = scmp.ne.s32.totalorder %s111, %s113
    %p117 = scmp.eq.s32.totalorder %s14, 0
    %p118 = por %p116, %p117
    %p119 = scmp.ne.s32.totalorder %s111, %s113
    %p120 = scmp.eq.s32.totalorder %s19, 1
    %p121 = por %p119, %p120
    %p122 = scmp.ne.s32.totalorder %s113, %s114
    %p123 = scmp.eq.s32.totalorder %s19, 0
    %p124 = por %p122, %p123
    %p125 = scmp.ne.s32.totalorder %s113, %s114
    %p126 = scmp.eq.s32.totalorder %s20, 1
    %p127 = por %p125, %p126
    %p129 = scmp.ne.s32.totalorder %s114, %s128
    %p130 = scmp.eq.s32.totalorder %s20, 0
    %p131 = por %p129, %p130
    %s133 = sadd.s32 %s132, 1
    %p136 = scmp.eq.s32.totalorder %s14, 1
    %p137 = scmp.ne.s32.totalorder %s132, %s134
    %p138 = scmp.eq.s32.totalorder %s14, 0
    %p139 = por %p137, %p138
    %p140 = scmp.ne.s32.totalorder %s132, %s134
    %p141 = scmp.eq.s32.totalorder %s19, 1
    %p142 = por %p140, %p141
    %p143 = scmp.ne.s32.totalorder %s134, %s135
    %p144 = scmp.eq.s32.totalorder %s19, 0
    %p145 = por %p143, %p144
    %p146 = scmp.ne.s32.totalorder %s134, %s135
    %p147 = scmp.eq.s32.totalorder %s20, 1
    %p148 = por %p146, %p147
    %p150 = scmp.ne.s32.totalorder %s135, %s149
    %p151 = scmp.eq.s32.totalorder %s20, 0
    %p152 = por %p150, %p151
    %s154 = sadd.s32 %s153, 1
    %p157 = scmp.eq.s32.totalorder %s14, 1
    %p158 = scmp.ne.s32.totalorder %s153, %s155
    %p159 = scmp.eq.s32.totalorder %s14, 0
    %p160 = por %p158, %p159
    %p161 = scmp.ne.s32.totalorder %s153, %s155
    %p162 = scmp.eq.s32.totalorder %s19, 1
    %p163 = por %p161, %p162
    %p164 = scmp.ne.s32.totalorder %s155, %s156
    %p165 = scmp.eq.s32.totalorder %s19, 0
    %p166 = por %p164, %p165
    %p167 = scmp.ne.s32.totalorder %s155, %s156
    %p168 = scmp.eq.s32.totalorder %s20, 1
    %p169 = por %p167, %p168
    %p171 = scmp.ne.s32.totalorder %s156, %s170
    %p172 = scmp.eq.s32.totalorder %s20, 0
    %p173 = por %p171, %p172
    %s174 = ssub.s32 %s14, %s21
    %p175 = scmp.eq.s32.totalorder %s174, 0
    %s177 = sadd.s32 %s176, 1
    %s178 = scalar_select %p175, %s176, %s177
    %p181 = pneg %p175
    %p182 = scmp.eq.s32.totalorder %s14, 1
    %p183 = por %p181, %p182
    %p184 = scmp.ne.s32.totalorder %s176, %s179
    %p185 = scmp.eq.s32.totalorder %s14, 0
    %p186 = por %p184, %p185
    %p187 = scmp.ne.s32.totalorder %s176, %s179
    %p188 = scmp.eq.s32.totalorder %s19, 1
    %p189 = por %p187, %p188
    %p190 = scmp.ne.s32.totalorder %s179, %s180
    %p191 = scmp.eq.s32.totalorder %s19, 0
    %p192 = por %p190, %p191
    %p193 = scmp.ne.s32.totalorder %s179, %s180
    %p194 = scmp.eq.s32.totalorder %s20, 1
    %p195 = por %p193, %p194
    %p197 = scmp.ne.s32.totalorder %s180, %s196
    %p198 = scmp.eq.s32.totalorder %s20, 0
    %p199 = por %p197, %p198
    %p200 = scmp.le.s32.totalorder 1, %s14
    %p201 = scmp.lt.s32.totalorder %s14, 3
    %p202 = pnand %p200, %p201
    %p203 = pneg %p202
    // Predicated region
    $region9: #{scse_forward.1} parent=5 // pred_check
      _
    $region10: #{scse_forward.1} parent=5 // pred_check_branch
      %205 = sbr.rel (%p202) target = $region12
    $region11: #{scse_forward.1} parent=5 // pred_region
      %s206 = ssub.s32 %s14, 1
      // Predicated region
      $region13: #{scse_forward.1} parent=11 // pred_check
        %p207 = pneg %p61
      $region14: #{scse_forward.1} parent=11 // pred_check_branch
        %209 = sbr.rel (%p207) target = $region16
      $region15: #{scse_forward.1} parent=11 // pred_region
        _
      $region16: #{scse_forward.1} parent=11 // pred_fallthru
        _
      // Predicated region
      $region17: #{scse_forward.1} parent=11 // pred_check
        %p210 = pneg %p82
      $region18: #{scse_forward.1} parent=11 // pred_check_branch
        %212 = sbr.rel (%p210) target = $region20
      $region19: #{scse_forward.1} parent=11 // pred_region
        _
      $region20: #{scse_forward.1} parent=11 // pred_fallthru
        _
      // Predicated region
      $region21: #{scse_forward.1} parent=11 // pred_check
        %p213 = pneg %p103
      $region22: #{scse_forward.1} parent=11 // pred_check_branch
        %215 = sbr.rel (%p213) target = $region24
      $region23: #{scse_forward.1} parent=11 // pred_region
        _
      $region24: #{scse_forward.1} parent=11 // pred_fallthru
        _
      // Predicated region
      $region25: #{scse_forward.1} parent=11 // pred_check
        %p216 = pneg %p124
      $region26: #{scse_forward.1} parent=11 // pred_check_branch
        %218 = sbr.rel (%p216) target = $region28
      $region27: #{scse_forward.1} parent=11 // pred_region
        _
      $region28: #{scse_forward.1} parent=11 // pred_fallthru
        _
      // Predicated region
      $region29: #{scse_forward.1} parent=11 // pred_check
        %p219 = pneg %p145
      $region30: #{scse_forward.1} parent=11 // pred_check_branch
        %221 = sbr.rel (%p219) target = $region32
      $region31: #{scse_forward.1} parent=11 // pred_region
        _
      $region32: #{scse_forward.1} parent=11 // pred_fallthru
        _
      // Predicated region
      $region33: #{scse_forward.1} parent=11 // pred_check
        %p222 = pneg %p166
      $region34: #{scse_forward.1} parent=11 // pred_check_branch
        %224 = sbr.rel (%p222) target = $region36
      $region35: #{scse_forward.1} parent=11 // pred_region
        _
      $region36: #{scse_forward.1} parent=11 // pred_fallthru
        _
    $region12: #{scse_forward.1} parent=5 // pred_fallthru
      _
    %p225 = scmp.lt.s32.totalorder %s14, 2
    // Predicated region
    $region37: #{scse_forward.1} parent=5 // pred_check
      %p226 = pneg %p225
    $region38: #{scse_forward.1} parent=5 // pred_check_branch
      %228 = sbr.rel (%p226) target = $region40
    $region39: #{scse_forward.1} parent=5 // pred_region
      // Predicated region
      $region41: #{scse_forward.1} parent=39 // pred_check
        %p229 = pneg %p34
      $region42: #{scse_forward.1} parent=39 // pred_check_branch
        %231 = sbr.rel (%p229) target = $region44
      $region43: #{scse_forward.1} parent=39 // pred_region
        %p232 = scmp.lt.s32.totalorder %s14, 1
        %s233 = scalar_select %p232, %s14, 1
        %s234 = smul.addr %s233, 8
        %s235 = smul.addr %s234, 8
        %s236 = scalar_lea.vmem %s0, %s235
      $region44: #{scse_forward.1} parent=39 // pred_fallthru
        _
    $region40: #{scse_forward.1} parent=5 // pred_fallthru
      _
    %p237 = scmp.le.s32.totalorder 1, %s14
    %p238 = scmp.lt.s32.totalorder %s14, 3
    %p239 = pnand %p237, %p238
    %p240 = pneg %p239
    // Predicated region
    $region45: #{scse_forward.1} parent=5 // pred_check
      _
    $region46: #{scse_forward.1} parent=5 // pred_check_branch
      %242 = sbr.rel (%p239) target = $region48
    $region47: #{scse_forward.1} parent=5 // pred_region
      %s243 = ssub.s32 %s14, 1
      %p244 = scmp.lt.s32.totalorder %s19, 1
      %s245 = scalar_select %p244, %s19, 1
      %s246 = smul.addr %s245, 8
      %s247 = smul.addr %s246, 8
      %s248 = scalar_lea.vmem %s0, %s247
      %p249 = pneg %p40
      %p250 = pneg %p37
      %p251 = pneg %p61
      %p252 = pneg %p58
      %p253 = pneg %p82
      %p254 = pneg %p79
      %p255 = pneg %p103
      %p256 = pneg %p100
      %p257 = pneg %p124
      %p258 = pneg %p121
      %p259 = pneg %p145
      %p260 = pneg %p142
      %p261 = pneg %p166
      %p262 = pneg %p163
      %p263 = pneg %p192
      %p264 = pneg %p189
      %p265 = scmp.lt.s32.totalorder %s19, 1
      %s266 = scalar_select %p265, %s19, 1
      %s267 = smul.addr %s266, 8
      %s268 = smul.addr %s267, 8
      %s269 = scalar_lea.vmem %s7, %s268
      %p270 = scmp.lt.s32.totalorder %s19, 1
      %s271 = scalar_select %p270, %s19, 1
      %s272 = smul.addr %s271, 8
      %s273 = smul.addr %s272, 8
      %s274 = scalar_lea.vmem %s0, %s273
      %p275 = scmp.lt.s32.totalorder %s19, 1
      %s276 = scalar_select %p275, %s19, 1
      %s277 = smul.addr %s276, 8
      %s278 = smul.addr %s277, 8
      %s279 = scalar_lea.vmem %s7, %s278
      %v280 = vld [vmem:[%s274] sm:$0xff]
      %v281 = vld [vmem:[%s274 + $0x8] sm:$0xff]
      %v282 = vld [vmem:[%s274 + $0x10] sm:$0xff]
      %v283 = vld [vmem:[%s274 + $0x18] sm:$0xff]
      %v284 = vld [vmem:[%s274 + $0x20] sm:$0xff]
      %v285 = vld [vmem:[%s274 + $0x28] sm:$0xff]
      %v286 = vld [vmem:[%s274 + $0x30] sm:$0xff]
      %v287 = vld [vmem:[%s274 + $0x38] sm:$0xff]
      %v288 = vadd.f32 %v280, %v281
      %289 = vadd.xlane.f32.xlu0 %v288
      %v290 = vpop.xlane.xlu0 %289
      %v291 = vadd.f32 %v282, %v283
      %292 = vadd.xlane.f32.xlu0 %v291
      %v293 = vpop.xlane.xlu0 %292
      %v294 = vadd.f32 %v284, %v285
      %295 = vadd.xlane.f32.xlu0 %v294
      %v296 = vpop.xlane.xlu0 %295
      %v297 = vadd.f32 %v286, %v287
      %298 = vadd.xlane.f32.xlu0 %v297
      %v299 = vpop.xlane.xlu0 %298
      %v300 = vmul.f32 %v290, 0.00390625
      %v301 = vmul.f32 %v293, 0.00390625
      %v302 = vmul.f32 %v296, 0.00390625
      %v303 = vmul.f32 %v299, 0.00390625
      %v304 = vld [vmem:[%s1] sm:$0x3]
      %v305 = vld [vmem:[%s2] sm:$0x3]
      %vm306 = vcmask 261120
      %v308 = vsel %vm306, %v304, 0
      %310 = vmatprep.subr.mxu0 0.0
      %311 = vmatpush1.msra.mxu0 %v300
      %312 = vmatprep.subr.mxu0 0.0
      %313 = vmatpush1.msra.mxu0 %v301
      %314 = vmatprep.subr.mxu0 0.0
      %315 = vmatpush1.msra.mxu0 %v302
      %316 = vmatprep.subr.mxu0 0.0
      %317 = vmatpush1.msra.mxu0 %v303
      %318 = vmatprep.subr.mxu0 0.0
      %319 = vmatpush1.msra.mxu0 0.0
      %320 = vmatprep.subr.mxu0 0.0
      %321 = vmatpush1.msra.mxu0 0.0
      %322 = vmatprep.subr.mxu0 0.0
      %323 = vmatpush1.msra.mxu0 0.0
      %324 = vmatprep.subr.mxu0 0.0
      %325 = vmatpush1.msra.mxu0 0.0
      %326 = vmatprep.subr.mxu0 0.0
      %327 = vmatpush1.msra.mxu0 0.0
      %328 = vmatprep.subr.mxu0 0.0
      %329 = vmatpush1.msra.mxu0 0.0
      %330 = vmatprep.subr.mxu0 0.0
      %331 = vmatpush1.msra.mxu0 0.0
      %332 = vmatprep.subr.mxu0 0.0
      %333 = vmatpush1.msra.mxu0 0.0
      %334 = vmatprep.subr.mxu0 0.0
      %335 = vmatpush1.msra.mxu0 0.0
      %336 = vmatprep.subr.mxu0 0.0
      %337 = vmatpush1.msra.mxu0 0.0
      %338 = vmatprep.subr.mxu0 0.0
      %339 = vmatpush1.msra.mxu0 0.0
      %340 = vmatprep.subr.mxu0 0.0
      %341 = vmatpush1.msra.mxu0 0.0
      %342 = vmatprep.subr.mxu0 0.0
      %343 = vmatpush1.msra.mxu0 0.0
      %344 = vmatprep.subr.mxu0 0.0
      %345 = vmatpush1.msra.mxu0 0.0
      %346 = vmatprep.subr.mxu0 0.0
      %347 = vmatpush1.msra.mxu0 0.0
      %348 = vmatprep.subr.mxu0 0.0
      %349 = vmatpush1.msra.mxu0 0.0
      %350 = vmatprep.subr.mxu0 0.0
      %351 = vmatpush1.msra.mxu0 0.0
      %352 = vmatprep.subr.mxu0 0.0
      %353 = vmatpush1.msra.mxu0 0.0
      %354 = vmatprep.subr.mxu0 0.0
      %355 = vmatpush1.msra.mxu0 0.0
      %356 = vmatprep.subr.mxu0 0.0
      %357 = vmatpush1.msra.mxu0 0.0
      %358 = vmatprep.subr.mxu0 0.0
      %359 = vmatpush1.msra.mxu0 0.0
      %360 = vmatprep.subr.mxu0 0.0
      %361 = vmatpush1.msra.mxu0 0.0
      %362 = vmatprep.subr.mxu0 0.0
      %363 = vmatpush1.msra.mxu0 0.0
      %364 = vmatprep.subr.mxu0 0.0
      %365 = vmatpush1.msra.mxu0 0.0
      %366 = vmatprep.subr.mxu0 0.0
      %367 = vmatpush1.msra.mxu0 0.0
      %368 = vmatprep.subr.mxu0 0.0
      %369 = vmatpush1.msra.mxu0 0.0
      %370 = vmatprep.subr.mxu0 0.0
      %371 = vmatpush1.msra.mxu0 0.0
      %372 = vmatprep.subr.mxu0 0.0
      %373 = vmatpush1.msra.mxu0 0.0
      %374 = vmatprep.mubr.f32.mxu0 0.0
      %375 = vmatmul.mubr.f32.gmra.mrb[0].mxu0 %v308
      %v376 = vpop.f32.mrb[0].mxu0
      %v377 = vadd.f32 %v305, %v376
      %v378 = vpop.f32.mrb[0].mxu0
      %379 = vdwg.mxu0
      %v380 = vmax.f32 %v377, 0.0
      %v381 = vld [vmem:[%s3] sm:$0xff]
      %v382 = vld [vmem:[%s3 + $0x8] sm:$0xff]
      %v383 = vld [vmem:[%s3 + $0x10] sm:$0xff]
      %v384 = vld [vmem:[%s3 + $0x18] sm:$0xff]
      %v385 = vld [vmem:[%s4] sm:$0xff]
      %v386 = vld [vmem:[%s4 + $0x8] sm:$0xff]
      %v387 = vld [vmem:[%s4 + $0x10] sm:$0xff]
      %v388 = vld [vmem:[%s4 + $0x18] sm:$0xff]
      %vm389 = vcmask 15360
      %v391 = vsel %vm389, %v381, 0
      %v394 = vsel %vm389, %v382, 0
      %v397 = vsel %vm389, %v383, 0
      %v400 = vsel %vm389, %v384, 0
      %vm402 = vcmask 1041408
      %v404 = vsel %vm402, %v380, 0
      %406 = vmatprep.subr.mxu0 0.0
      %407 = vmatpush1.msra.mxu0 %v404
      %408 = vmatprep.subr.mxu0 0.0
      %409 = vmatpush1.msra.mxu0 0.0
      %410 = vmatprep.subr.mxu0 0.0
      %411 = vmatpush1.msra.mxu0 0.0
      %412 = vmatprep.subr.mxu0 0.0
      %413 = vmatpush1.msra.mxu0 0.0
      %414 = vmatprep.subr.mxu0 0.0
      %415 = vmatpush1.msra.mxu0 0.0
      %416 = vmatprep.subr.mxu0 0.0
      %417 = vmatpush1.msra.mxu0 0.0
      %418 = vmatprep.subr.mxu0 0.0
      %419 = vmatpush1.msra.mxu0 0.0
      %420 = vmatprep.subr.mxu0 0.0
      %421 = vmatpush1.msra.mxu0 0.0
      %422 = vmatprep.subr.mxu0 0.0
      %423 = vmatpush1.msra.mxu0 0.0
      %424 = vmatprep.subr.mxu0 0.0
      %425 = vmatpush1.msra.mxu0 0.0
      %426 = vmatprep.subr.mxu0 0.0
      %427 = vmatpush1.msra.mxu0 0.0
      %428 = vmatprep.subr.mxu0 0.0
      %429 = vmatpush1.msra.mxu0 0.0
      %430 = vmatprep.subr.mxu0 0.0
      %431 = vmatpush1.msra.mxu0 0.0
      %432 = vmatprep.subr.mxu0 0.0
      %433 = vmatpush1.msra.mxu0 0.0
      %434 = vmatprep.subr.mxu0 0.0
      %435 = vmatpush1.msra.mxu0 0.0
      %436 = vmatprep.subr.mxu0 0.0
      %437 = vmatpush1.msra.mxu0 0.0
      %438 = vmatprep.subr.mxu0 0.0
      %439 = vmatpush1.msra.mxu0 0.0
      %440 = vmatprep.subr.mxu0 0.0
      %441 = vmatpush1.msra.mxu0 0.0
      %442 = vmatprep.subr.mxu0 0.0
      %443 = vmatpush1.msra.mxu0 0.0
      %444 = vmatprep.subr.mxu0 0.0
      %445 = vmatpush1.msra.mxu0 0.0
      %446 = vmatprep.subr.mxu0 0.0
      %447 = vmatpush1.msra.mxu0 0.0
      %448 = vmatprep.subr.mxu0 0.0
      %449 = vmatpush1.msra.mxu0 0.0
      %450 = vmatprep.subr.mxu0 0.0
      %451 = vmatpush1.msra.mxu0 0.0
      %452 = vmatprep.subr.mxu0 0.0
      %453 = vmatpush1.msra.mxu0 0.0
      %454 = vmatprep.subr.mxu0 0.0
      %455 = vmatpush1.msra.mxu0 0.0
      %456 = vmatprep.subr.mxu0 0.0
      %457 = vmatpush1.msra.mxu0 0.0
      %458 = vmatprep.subr.mxu0 0.0
      %459 = vmatpush1.msra.mxu0 0.0
      %460 = vmatprep.subr.mxu0 0.0
      %461 = vmatpush1.msra.mxu0 0.0
      %462 = vmatprep.subr.mxu0 0.0
      %463 = vmatpush1.msra.mxu0 0.0
      %464 = vmatprep.subr.mxu0 0.0
      %465 = vmatpush1.msra.mxu0 0.0
      %466 = vmatprep.subr.mxu0 0.0
      %467 = vmatpush1.msra.mxu0 0.0
      %468 = vmatprep.subr.mxu0 0.0
      %469 = vmatpush1.msra.mxu0 0.0
      %470 = vmatprep.mubr.f32.mxu0 0.0
      %471 = vmatmul.mubr.f32.gmra.mrb[0].mxu0 %v391
      %v472 = vpop.f32.mrb[0].mxu0
      %v473 = vadd.f32 %v385, %v472
      %v474 = vpop.f32.mrb[0].mxu0
      %475 = vmatprep.mubr.f32.mxu0 0.0
      %476 = vmatmul.mubr.f32.gmra.mrb[0].mxu0 %v394
      %v477 = vpop.f32.mrb[0].mxu0
      %v478 = vadd.f32 %v386, %v477
      %v479 = vpop.f32.mrb[0].mxu0
      %480 = vmatprep.mubr.f32.mxu0 0.0
      %481 = vmatmul.mubr.f32.gmra.mrb[0].mxu0 %v397
      %v482 = vpop.f32.mrb[0].mxu0
      %v483 = vadd.f32 %v387, %v482
      %v484 = vpop.f32.mrb[0].mxu0
      %485 = vmatprep.mubr.f32.mxu0 0.0
      %486 = vmatmul.mubr.f32.gmra.mrb[0].mxu0 %v400
      %v487 = vpop.f32.mrb[0].mxu0
      %v488 = vadd.f32 %v388, %v487
      %v489 = vpop.f32.mrb[0].mxu0
      %490 = vdwg.mxu0
      %v491 = vxor.u32 %v473, 2147483648
      %v492 = vxor.u32 %v478, 2147483648
      %v493 = vxor.u32 %v483, 2147483648
      %v494 = vxor.u32 %v488, 2147483648
      %v495 = vmul.f32 %v491, 1.442695
      %v496 = vpow.pop %v495
      %v497 = vmul.f32 %v492, 1.442695
      %v498 = vpow.pop %v497
      %v499 = vmul.f32 %v493, 1.442695
      %v500 = vpow.pop %v499
      %v501 = vmul.f32 %v494, 1.442695
      %v502 = vpow.pop %v501
      %v503 = vadd.f32 %v496, 1.0
      %v504 = vadd.f32 %v498, 1.0
      %v505 = vadd.f32 %v500, 1.0
      %v506 = vadd.f32 %v502, 1.0
      %v507 = vrcp.pop %v503
      %v508 = vmul.f32 1.0, %v507
      %v509 = vrcp.pop %v504
      %v510 = vmul.f32 1.0, %v509
      %v511 = vrcp.pop %v505
      %v512 = vmul.f32 1.0, %v511
      %v513 = vrcp.pop %v506
      %v514 = vmul.f32 1.0, %v513
      %v515 = vld [vmem:[%s5] sm:$0x1]
      %s516 = sld [smem:[#allocation2]]
      %v517 = vstv %s516
      %v519 = vsel %vm306, %v515, 0
      %521 = vmatprep.subr.mxu0 %v281
      %522 = vmatpush1.msra.mxu0 %v280
      %523 = vmatprep.subr.mxu0 %v283
      %524 = vmatpush1.msra.mxu0 %v282
      %525 = vmatprep.subr.mxu0 %v285
      %526 = vmatpush1.msra.mxu0 %v284
      %527 = vmatprep.subr.mxu0 %v287
      %528 = vmatpush1.msra.mxu0 %v286
      %529 = vmatprep.subr.mxu0 0.0
      %530 = vmatpush1.msra.mxu0 0.0
      %531 = vmatprep.subr.mxu0 0.0
      %532 = vmatpush1.msra.mxu0 0.0
      %533 = vmatprep.subr.mxu0 0.0
      %534 = vmatpush1.msra.mxu0 0.0
      %535 = vmatprep.subr.mxu0 0.0
      %536 = vmatpush1.msra.mxu0 0.0
      %537 = vmatprep.subr.mxu0 0.0
      %538 = vmatpush1.msra.mxu0 0.0
      %539 = vmatprep.subr.mxu0 0.0
      %540 = vmatpush1.msra.mxu0 0.0
      %541 = vmatprep.subr.mxu0 0.0
      %542 = vmatpush1.msra.mxu0 0.0
      %543 = vmatprep.subr.mxu0 0.0
      %544 = vmatpush1.msra.mxu0 0.0
      %545 = vmatprep.subr.mxu0 0.0
      %546 = vmatpush1.msra.mxu0 0.0
      %547 = vmatprep.subr.mxu0 0.0
      %548 = vmatpush1.msra.mxu0 0.0
      %549 = vmatprep.subr.mxu0 0.0
      %550 = vmatpush1.msra.mxu0 0.0
      %551 = vmatprep.subr.mxu0 0.0
      %552 = vmatpush1.msra.mxu0 0.0
      %553 = vmatprep.subr.mxu0 0.0
      %554 = vmatpush1.msra.mxu0 0.0
      %555 = vmatprep.subr.mxu0 0.0
      %556 = vmatpush1.msra.mxu0 0.0
      %557 = vmatprep.subr.mxu0 0.0
      %558 = vmatpush1.msra.mxu0 0.0
      %559 = vmatprep.subr.mxu0 0.0
      %560 = vmatpush1.msra.mxu0 0.0
      %561 = vmatprep.subr.mxu0 0.0
      %562 = vmatpush1.msra.mxu0 0.0
      %563 = vmatprep.subr.mxu0 0.0
      %564 = vmatpush1.msra.mxu0 0.0
      %565 = vmatprep.subr.mxu0 0.0
      %566 = vmatpush1.msra.mxu0 0.0
      %567 = vmatprep.subr.mxu0 0.0
      %568 = vmatpush1.msra.mxu0 0.0
      %569 = vmatprep.subr.mxu0 0.0
      %570 = vmatpush1.msra.mxu0 0.0
      %571 = vmatprep.subr.mxu0 0.0
      %572 = vmatpush1.msra.mxu0 0.0
      %573 = vmatprep.subr.mxu0 0.0
      %574 = vmatpush1.msra.mxu0 0.0
      %575 = vmatprep.subr.mxu0 0.0
      %576 = vmatpush1.msra.mxu0 0.0
      %577 = vmatprep.subr.mxu0 0.0
      %578 = vmatpush1.msra.mxu0 0.0
      %579 = vmatprep.subr.mxu0 0.0
      %580 = vmatpush1.msra.mxu0 0.0
      %581 = vmatprep.subr.mxu0 0.0
      %582 = vmatpush1.msra.mxu0 0.0
      %583 = vmatprep.subr.mxu0 0.0
      %584 = vmatpush1.msra.mxu0 0.0
      %585 = vmatprep.mubr.f32.mxu0 0.0
      %586 = vmatmul.mubr.f32.gmra.mrb[0].mxu0 %v519
      %v587 = vpop.f32.mrb[0].mxu0
      %v588 = vadd.f32 %v517, %v587
      %v589 = vpop.f32.mrb[0].mxu0
      %v590 = vadd.f32 %v517, %v589
      %591 = vdwg.mxu0
      %v592 = vxor.u32 %v588, 2147483648
      %v593 = vxor.u32 %v590, 2147483648
      %v594 = vmul.f32 %v592, 1.442695
      %v595 = vpow.pop %v594
      %v596 = vmul.f32 %v593, 1.442695
      %v597 = vpow.pop %v596
      %v598 = vadd.f32 %v595, 1.0
      %v599 = vadd.f32 %v597, 1.0
      %v600 = vrcp.pop %v598
      %v601 = vmul.f32 1.0, %v600
      %v602 = vrcp.pop %v599
      %v603 = vmul.f32 1.0, %v602
      %605 = vset.pattern.permute.xlu0 0
      %606 = vperm.xlu0 %605, %v508
      %v607 = vpop.permute.xlu0 %606
      %610 = vset.pattern.permute.xlu0 0
      %611 = vperm.xlu0 %610, %v510
      %v612 = vpop.permute.xlu0 %611
      %615 = vset.pattern.permute.xlu0 0
      %616 = vperm.xlu0 %615, %v512
      %v617 = vpop.permute.xlu0 %616
      %620 = vset.pattern.permute.xlu0 0
      %621 = vperm.xlu0 %620, %v514
      %v622 = vpop.permute.xlu0 %621
      %v624 = vlaneseq
      %v625 = vshrl.u32 %v624, 7
      %v626 = vsub.s32 0, %v625
      %v627 = vrot.slane %v601, %v626
      %v628 = vlaneseq
      %v629 = vshrl.u32 %v628, 7
      %v630 = vsub.s32 0, %v629
      %v631 = vrot.slane %v603, %v630
      %v632 = vadd.f32 %v607, %v627
      %v633 = vadd.f32 %v607, %v631
      %v634 = vadd.f32 %v612, %v627
      %v635 = vadd.f32 %v612, %v631
      %v636 = vadd.f32 %v617, %v627
      %v637 = vadd.f32 %v617, %v631
      %v638 = vadd.f32 %v622, %v627
      %v639 = vadd.f32 %v622, %v631
      %v640 = vmul.f32 %v280, %v632
      %v641 = vmul.f32 %v281, %v633
      %v642 = vmul.f32 %v282, %v634
      %v643 = vmul.f32 %v283, %v635
      %v644 = vmul.f32 %v284, %v636
      %v645 = vmul.f32 %v285, %v637
      %v646 = vmul.f32 %v286, %v638
      %v647 = vmul.f32 %v287, %v639
      %648 = vst [vmem:[%s279] sm:$0xff] %v640
      %649 = vst [vmem:[%s279 + $0x8] sm:$0xff] %v641
      %650 = vst [vmem:[%s279 + $0x10] sm:$0xff] %v642
      %651 = vst [vmem:[%s279 + $0x18] sm:$0xff] %v643
      %652 = vst [vmem:[%s279 + $0x20] sm:$0xff] %v644
      %653 = vst [vmem:[%s279 + $0x28] sm:$0xff] %v645
      %654 = vst [vmem:[%s279 + $0x30] sm:$0xff] %v646
      %655 = vst [vmem:[%s279 + $0x38] sm:$0xff] %v647
      %p656 = scmp.lt.s32.totalorder %s19, 1
      %s657 = scalar_select %p656, %s19, 1
      %s658 = smul.addr %s657, 8
      %s659 = smul.addr %s658, 8
      %s660 = scalar_lea.vmem %s7, %s659
      // Predicated region
      $region49: #{scse_forward.1} parent=47 // pred_check
        %p661 = pneg %p189
      $region50: #{scse_forward.1} parent=47 // pred_check_branch
        %663 = sbr.rel (%p661) target = $region52
      $region51: #{scse_forward.1} parent=47 // pred_region
        _
      $region52: #{scse_forward.1} parent=47 // pred_fallthru
        _
    $region48: #{scse_forward.1} parent=5 // pred_fallthru
      _
    %p664 = scmp.le.s32.totalorder 2, %s14
    // Predicated region
    $region53: #{scse_forward.1} parent=5 // pred_check
      %p665 = pneg %p664
    $region54: #{scse_forward.1} parent=5 // pred_check_branch
      %667 = sbr.rel (%p665) target = $region56
    $region55: #{scse_forward.1} parent=5 // pred_region
      %s668 = ssub.s32 %s14, 2
      // Predicated region
      $region57: #{scse_forward.1} parent=55 // pred_check
        %p669 = pneg %p195
      $region58: #{scse_forward.1} parent=55 // pred_check_branch
        %671 = sbr.rel (%p669) target = $region60
      $region59: #{scse_forward.1} parent=55 // pred_region
        %p672 = scmp.lt.s32.totalorder %s20, 1
        %s673 = scalar_select %p672, %s20, 1
        %s674 = smul.addr %s673, 8
        %s675 = smul.addr %s674, 8
        %s676 = scalar_lea.vmem %s7, %s675
      $region60: #{scse_forward.1} parent=55 // pred_fallthru
        _
    $region56: #{scse_forward.1} parent=5 // pred_fallthru
      _
  $region6: #{scse_forward.1} parent=0 // loop_footer
    %s18 = sadd.s32 1, %s14
  $region7: #{scse_forward.1} parent=0 // loop_footer_branch
    %13 = sbr.rel target = $region3
  $region8: #{scse_forward.1} parent=0 // loop_exit
    _

</llo_original>
